<compile_context>
chip_gen: v7x
topology: tpu7x:2x2x1
jax: 0.10.0
libtpu: 0.0.40
codegen_flags: <defaults>
</compile_context>

<pallas_src>
import functools

import jax
import jax.numpy as jnp
from jax.experimental import pallas as pl
from jax.experimental.pallas import tpu as pltpu


def _attn_kernel(x_ref, w1_ref, b1_ref, w2_ref, b2_ref, o_ref, *, approx_recip):
    # x_ref : (N, L)  nodes on the sublane axis; L lanes are either the folded
    #                 batch*feature axis (folded path) or an F tile of one
    #                 batch (native path, batch dim squeezed by the BlockSpec).
    # w1_ref: (H, N)  tanh_layer.weight     (compute dtype)
    # b1_ref: (H, 1)  tanh_layer.bias       (f32)
    # w2_ref: (N, H)  softmax_layer.weight  (compute dtype)
    # b2_ref: (N, 1)  softmax_layer.bias    (f32)
    # o_ref : (N, L)  softmax over the node axis
    cd = w1_ref.dtype
    x = x_ref[...].astype(cd)                                   # (N, L)

    # h^T = tanh(W1 @ x + b1)  -- one MXU push for the whole slab, f32 acc.
    h = jnp.dot(w1_ref[...], x, preferred_element_type=jnp.float32)
    h = jnp.tanh(h + b1_ref[...])                               # (H, L) f32

    # logits^T = W2 @ h^T + b2
    logits = jnp.dot(w2_ref[...], h.astype(cd),
                     preferred_element_type=jnp.float32)
    logits = logits + b2_ref[...]                               # (N, L) f32

    # Softmax over the node (sublane) axis == dim=-1 of the PyTorch forward.
    m = jnp.max(logits, axis=0, keepdims=True)
    e = jnp.exp(logits - m)
    denom = jnp.sum(e, axis=0, keepdims=True)
    if approx_recip:
        out = e * pl.reciprocal(denom, approx=True)             # EUP slot
    else:
        out = e / denom                                         # exact (default)
    o_ref[...] = out.astype(o_ref.dtype)


def _vmem_capacity_bytes():
    """Physical VMEM of the local chip; 128 MiB fallback (v5e/v6e)."""
    try:
        cap = getattr(pltpu.get_tpu_info(), "vmem_capacity_bytes", None)
        if cap:
            return int(cap)
    except Exception:
        pass
    return 128 * 1024 * 1024


def _default_vmem_limit():
    # ~96 MiB on 128 MiB parts (v5e/v6e), ~48 MiB on v7x (64 MiB VMEM).
    return int(min((_vmem_capacity_bytes() * 3) // 4, 96 * 1024 * 1024))


def _choose_lane_tile(L, N, H, *, vmem_budget_bytes, in_itemsize, out_itemsize):
    """Largest lane tile: full extent, or a 128-multiple dividing L, that fits."""
    # Per-lane-column VMEM cost: double-buffered input & output slabs plus the
    # f32 intermediates (h is HxL; logits / exp / pre-store out are ~3x NxL).
    per_col = 2 * N * in_itemsize + 2 * N * out_itemsize + (H + 3 * N) * 4
    weight_bytes = (2 * H * N + H + N) * 4 * 2
    avail = max(0, vmem_budget_bytes - weight_bytes)
    max_cols = max(1, avail // per_col)
    if L <= max_cols:
        return L
    tl = max(128, (max_cols // 128) * 128)
    while tl > 128 and L % tl:
        tl -= 128
    # Fall back to the full extent (no hard assert) if no 128-multiple divides L.
    return tl if L % tl == 0 else L


def prepare_params(w1, b1, w2, b2, *, compute_dtype=jnp.bfloat16):
    """Cast/reshape the SelfAttentionLayer parameters once (not per call)."""
    H, N = w1.shape
    assert w2.shape == (N, H) and b1.shape == (H,) and b2.shape == (N,)
    return (jnp.asarray(w1, compute_dtype),                  # (H, N)
            jnp.asarray(b1, jnp.float32).reshape(H, 1),      # (H, 1)
            jnp.asarray(w2, compute_dtype),                  # (N, H)
            jnp.asarray(b2, jnp.float32).reshape(N, 1))      # (N, 1)


def self_attention_layer(x, params, *, layout="auto", out_dtype=None,
                         lane_tile=None, vmem_limit_bytes=None,
                         approx_softmax_recip=False):
    """SelfAttentionLayer forward.  x: (B, num_nodes, F) -> (B, num_nodes, F).

    `params` comes from prepare_params() (native PyTorch weight orientation,
    pre-cast to the matmul compute dtype).  Pass bf16 `x` / out_dtype=bf16 to
    halve the HBM streams on large, memory-bound F when the consumer allows.
    """
    w1c, b1c, w2c, b2c = params
    B, N, F = x.shape
    H = w1c.shape[0]
    assert w1c.shape == (H, N) and w2c.shape == (N, H)
    assert b1c.shape == (H, 1) and b2c.shape == (N, 1)

    if out_dtype is None:
        out_dtype = x.dtype
    if vmem_limit_bytes is None:
        vmem_limit_bytes = _default_vmem_limit()
    if layout == "auto":
        # F already lane-dense -> keep per-batch slabs (no big HBM transpose);
        # otherwise fold the batch dim onto the lane axis.
        layout = "native" if F >= 512 else "folded"

    kernel = functools.partial(_attn_kernel,
                               approx_recip=bool(approx_softmax_recip))
    in_itemsize = jnp.dtype(x.dtype).itemsize
    out_itemsize = jnp.dtype(out_dtype).itemsize
    vmem_budget = (vmem_limit_bytes * 3) // 4   # headroom for compiler scratch
    compiler_params_kwargs = dict(vmem_limit_bytes=vmem_limit_bytes)

    if layout == "folded":
        L = B * F
        tl = lane_tile or _choose_lane_tile(
            L, N, H, vmem_budget_bytes=vmem_budget,
            in_itemsize=in_itemsize, out_itemsize=out_itemsize)
        assert L % tl == 0
        # (B, N, F) -> (N, B*F): a tiny wrapper transpose (~1 KiB at the real
        # model shapes) that makes the kernel slab lane-dense and lets one
        # pair of matmuls cover every batch.
        x2d = jnp.swapaxes(x, 0, 1).reshape(N, L)
        out2d = pl.pallas_call(
            kernel,
            out_shape=jax.ShapeDtypeStruct((N, L), out_dtype),
            grid_spec=pltpu.PrefetchScalarGridSpec(
                num_scalar_prefetch=0,
                grid=(L // tl,),
                in_specs=[
                    pl.BlockSpec((N, tl), lambda j: (0, j)),   # activation slab
                    pl.BlockSpec((H, N), lambda j: (0, 0)),    # W1 resident
                    pl.BlockSpec((H, 1), lambda j: (0, 0)),    # b1
                    pl.BlockSpec((N, H), lambda j: (0, 0)),    # W2 resident
                    pl.BlockSpec((N, 1), lambda j: (0, 0)),    # b2
                ],
                out_specs=pl.BlockSpec((N, tl), lambda j: (0, j)),
            ),
            compiler_params=pltpu.CompilerParams(
                # Single "parallel" axis: collapses to one step at small
                # shapes; when L is large enough to tile, the lane tiles shard
                # across v7x's two TensorCores.
                dimension_semantics=("parallel",),
                **compiler_params_kwargs,
            ),
        )(x2d, w1c, b1c, w2c, b2c)
        return jnp.swapaxes(out2d.reshape(N, B, F), 0, 1)

    # layout == "native": F on the lane axis, one batch slab per grid row.
    f_tile = lane_tile or _choose_lane_tile(
        F, N, H, vmem_budget_bytes=vmem_budget,
        in_itemsize=in_itemsize, out_itemsize=out_itemsize)
    assert F % f_tile == 0
    return pl.pallas_call(
        kernel,
        out_shape=jax.ShapeDtypeStruct((B, N, F), out_dtype),
        grid_spec=pltpu.PrefetchScalarGridSpec(
            num_scalar_prefetch=0,
            grid=(B, F // f_tile),
            in_specs=[
                pl.BlockSpec((None, N, f_tile), lambda b, j: (b, 0, j)),
                pl.BlockSpec((H, N), lambda b, j: (0, 0)),
                pl.BlockSpec((H, 1), lambda b, j: (0, 0)),
                pl.BlockSpec((N, H), lambda b, j: (0, 0)),
                pl.BlockSpec((N, 1), lambda b, j: (0, 0)),
            ],
            out_specs=pl.BlockSpec((None, N, f_tile), lambda b, j: (b, 0, j)),
        ),
        compiler_params=pltpu.CompilerParams(
            dimension_semantics=("parallel", "parallel"),
            **compiler_params_kwargs,
        ),
    )(x, w1c, b1c, w2c, b2c)


def _reference(x, w1, b1, w2, b2):
    # Pure-JAX reference mirroring the PyTorch forward exactly (f32).
    xt = jnp.swapaxes(x, -1, -2)             # (B, F, N)
    h = jnp.tanh(xt @ w1.T + b1)             # (B, F, H)
    logits = h @ w2.T + b2                   # (B, F, N)
    s = jax.nn.softmax(logits, axis=-1)
    return jnp.swapaxes(s, -1, -2)           # (B, N, F)


if __name__ == "__main__":
    # Shapes consistent with SAGCN_model: bs=2, num_patch (num_nodes)=16,
    # gcn_hidden_dim (F)=8, attention_hidden_dim (H)=32.
    B, N, F, H = 2, 16, 8, 32

    key = jax.random.PRNGKey(0)
    kx, k1, k2, k3, k4 = jax.random.split(key, 5)
    x = jax.random.normal(kx, (B, N, F), dtype=jnp.float32)

    # Deterministic parameter init (PyTorch Linear-style uniform bounds).
    bound1 = 1.0 / jnp.sqrt(N)
    w1 = jax.random.uniform(k1, (H, N), minval=-bound1, maxval=bound1,
                            dtype=jnp.float32)
    b1 = jax.random.uniform(k2, (H,), minval=-bound1, maxval=bound1,
                            dtype=jnp.float32)
    bound2 = 1.0 / jnp.sqrt(H)
    w2 = jax.random.uniform(k3, (N, H), minval=-bound2, maxval=bound2,
                            dtype=jnp.float32)
    b2 = jax.random.uniform(k4, (N,), minval=-bound2, maxval=bound2,
                            dtype=jnp.float32)

    ref = _reference(x, w1, b1, w2, b2)

    # Parameters are prepared (cast/reshaped) ONCE, outside the per-call path.
    params_f32 = prepare_params(w1, b1, w2, b2, compute_dtype=jnp.float32)
    params_bf16 = prepare_params(w1, b1, w2, b2, compute_dtype=jnp.bfloat16)

    # 1) Strict f32 path (lane-folded layout, single grid step): 1e-5 match.
    out_f32 = jax.block_until_ready(self_attention_layer(x, params_f32))
    assert out_f32.shape == (B, N, F)
    assert jnp.allclose(out_f32, ref, atol=1e-5, rtol=1e-5)
    assert jnp.allclose(out_f32.sum(axis=1), jnp.ones((B, F)), atol=1e-5)

    # 2) Fast default path: bf16 matmul operands, f32 accumulation / softmax.
    out_fast = jax.block_until_ready(self_attention_layer(x, params_bf16))
    assert out_fast.shape == (B, N, F) and out_fast.dtype == x.dtype
    assert jnp.allclose(out_fast, ref, atol=1e-2, rtol=1e-2)
    assert jnp.allclose(out_fast.sum(axis=1), jnp.ones((B, F)), atol=1e-2)

    # 3) The native (F-on-lanes) layout path still works at small shapes.
    out_native = jax.block_until_ready(
        self_attention_layer(x, params_f32, layout="native"))
    assert jnp.allclose(out_native, ref, atol=1e-5, rtol=1e-5)

    # 4) Large-F config exercises the auto "native" path + lane-tile chooser.
    F2 = 1024
    xl = jax.random.normal(jax.random.PRNGKey(1), (B, N, F2), dtype=jnp.float32)
    refl = _reference(xl, w1, b1, w2, b2)
    outl = jax.block_until_ready(self_attention_layer(xl, params_bf16))
    assert outl.shape == (B, N, F2)
    assert jnp.allclose(outl, refl, atol=1e-2, rtol=1e-2)

    print("KERNEL_OK")
</pallas_src>

<mosaic_0001>
module attributes {stable_mosaic.version = 11 : i64} {
  func.func @_attn_kernel(%arg0: i32, %arg1: memref<16x16xf32, #tpu.memory_space<vmem>>, %arg2: memref<32x16xf32, #tpu.memory_space<vmem>>, %arg3: memref<32x1xf32, #tpu.memory_space<vmem>>, %arg4: memref<16x32xf32, #tpu.memory_space<vmem>>, %arg5: memref<16x1xf32, #tpu.memory_space<vmem>>, %arg6: memref<16x16xf32, #tpu.memory_space<vmem>>) attributes {dimension_semantics = [#tpu.dimension_semantics<parallel>], iteration_bounds = array<i64: 1>, scalar_prefetch = 0 : i64, scratch_operands = 0 : i64, tpu.core_type = #tpu.core_type<tc>, window_params = [{transform_indices = @transform_0, window_bounds = array<i64: 16, 16>}, {pipeline_mode = #tpu.pipeline_mode<synchronous>, transform_indices = @transform_1, window_bounds = array<i64: 32, 16>}, {pipeline_mode = #tpu.pipeline_mode<synchronous>, transform_indices = @transform_2, window_bounds = array<i64: 32, 1>}, {pipeline_mode = #tpu.pipeline_mode<synchronous>, transform_indices = @transform_3, window_bounds = array<i64: 16, 32>}, {pipeline_mode = #tpu.pipeline_mode<synchronous>, transform_indices = @transform_4, window_bounds = array<i64: 16, 1>}, {transform_indices = @transform_5, window_bounds = array<i64: 16, 16>}]} {
    %c0 = arith.constant 0 : index
    %c0_0 = arith.constant 0 : index
    %0 = vector.load %arg1[%c0, %c0_0] : memref<16x16xf32, #tpu.memory_space<vmem>>, vector<16x16xf32>
    %c0_1 = arith.constant 0 : index
    %c0_2 = arith.constant 0 : index
    %1 = vector.load %arg2[%c0_1, %c0_2] : memref<32x16xf32, #tpu.memory_space<vmem>>, vector<32x16xf32>
    %cst = arith.constant dense<0.000000e+00> : vector<32x16xf32>
    %2 = tpu.matmul %1, %0, %cst {dimension_numbers = #tpu.dot_dimension_numbers<[1], [0], [0], [1], [0, 0, 1, 1], [], []>} : vector<32x16xf32>, vector<16x16xf32>, vector<32x16xf32> -> vector<32x16xf32>
    %c0_3 = arith.constant 0 : index
    %c0_4 = arith.constant 0 : index
    %3 = vector.load %arg3[%c0_3, %c0_4] : memref<32x1xf32, #tpu.memory_space<vmem>>, vector<32x1xf32>
    %4 = vector.broadcast %3 : vector<32x1xf32> to vector<32x16xf32>
    %5 = arith.addf %2, %4 : vector<32x16xf32>
    %6 = math.tanh %5 : vector<32x16xf32>
    %c0_5 = arith.constant 0 : index
    %c0_6 = arith.constant 0 : index
    %7 = vector.load %arg4[%c0_5, %c0_6] : memref<16x32xf32, #tpu.memory_space<vmem>>, vector<16x32xf32>
    %cst_7 = arith.constant dense<0.000000e+00> : vector<16x16xf32>
    %8 = tpu.matmul %7, %6, %cst_7 {dimension_numbers = #tpu.dot_dimension_numbers<[1], [0], [0], [1], [0, 0, 1, 1], [], []>} : vector<16x32xf32>, vector<32x16xf32>, vector<16x16xf32> -> vector<16x16xf32>
    %c0_8 = arith.constant 0 : index
    %c0_9 = arith.constant 0 : index
    %9 = vector.load %arg5[%c0_8, %c0_9] : memref<16x1xf32, #tpu.memory_space<vmem>>, vector<16x1xf32>
    %10 = vector.broadcast %9 : vector<16x1xf32> to vector<16x16xf32>
    %11 = arith.addf %8, %10 : vector<16x16xf32>
    %cst_10 = arith.constant dense<0xFF800000> : vector<16xf32>
    %12 = vector.multi_reduction <maximumf>, %11, %cst_10 [0] : vector<16x16xf32> to vector<16xf32>
    %13 = vector.shape_cast %12 : vector<16xf32> to vector<1x16xf32>
    %14 = vector.broadcast %13 : vector<1x16xf32> to vector<16x16xf32>
    %15 = arith.subf %11, %14 : vector<16x16xf32>
    %16 = math.exp %15 : vector<16x16xf32>
    %cst_11 = arith.constant dense<0.000000e+00> : vector<16xf32>
    %17 = vector.multi_reduction <add>, %16, %cst_11 [0] : vector<16x16xf32> to vector<16xf32>
    %18 = vector.shape_cast %17 : vector<16xf32> to vector<1x16xf32>
    %19 = vector.broadcast %18 : vector<1x16xf32> to vector<16x16xf32>
    %20 = arith.divf %16, %19 : vector<16x16xf32>
    %c0_12 = arith.constant 0 : index
    %c0_13 = arith.constant 0 : index
    %21 = vector.load %arg6[%c0_12, %c0_13] : memref<16x16xf32, #tpu.memory_space<vmem>>, vector<16x16xf32>
    tpu.vector_store %arg6[%c0_12, %c0_13], %20 {strides = array<i32>} : memref<16x16xf32, #tpu.memory_space<vmem>>, vector<16x16xf32>,
    return
  }
  func.func @transform_0(%arg0: i32) -> (i32, i32) {
    %c0_i32 = arith.constant 0 : i32
    %c0_i32_0 = arith.constant 0 : i32
    return %c0_i32, %arg0 : i32, i32
  }
  func.func @transform_1(%arg0: i32) -> (i32, i32) {
    %c0_i32 = arith.constant 0 : i32
    %c0_i32_0 = arith.constant 0 : i32
    %c0_i32_1 = arith.constant 0 : i32
    return %c0_i32, %c0_i32_0 : i32, i32
  }
  func.func @transform_2(%arg0: i32) -> (i32, i32) {
    %c0_i32 = arith.constant 0 : i32
    %c0_i32_0 = arith.constant 0 : i32
    %c0_i32_1 = arith.constant 0 : i32
    return %c0_i32, %c0_i32_0 : i32, i32
  }
  func.func @transform_3(%arg0: i32) -> (i32, i32) {
    %c0_i32 = arith.constant 0 : i32
    %c0_i32_0 = arith.constant 0 : i32
    %c0_i32_1 = arith.constant 0 : i32
    return %c0_i32, %c0_i32_0 : i32, i32
  }
  func.func @transform_4(%arg0: i32) -> (i32, i32) {
    %c0_i32 = arith.constant 0 : i32
    %c0_i32_0 = arith.constant 0 : i32
    %c0_i32_1 = arith.constant 0 : i32
    return %c0_i32, %c0_i32_0 : i32, i32
  }
  func.func @transform_5(%arg0: i32) -> (i32, i32) {
    %c0_i32 = arith.constant 0 : i32
    %c0_i32_0 = arith.constant 0 : i32
    return %c0_i32, %arg0 : i32, i32
  }
}

</mosaic_0001>

<llo_original>
// kernel: tpu_custom_call.1
$region0: #{tpu_custom_call.1}
  #allocation0 [shape = 'u32[]', space=smem, size = 0x4, offset = 0x4, fixed_abs, tag = 'smem constant byte address 0x4 - core index']
  #allocation1 [shape = 'u32[144,128]{1,0:T(1,128)}', space=vmem, size = 0x12000, scoped, tag = 'internal scratch']
  %s0 = inlined_call_operand.hbm [shape: f32[16,16], index: 0, kind: input, shape index: {}]
  %s1 = inlined_call_operand.hbm [shape: f32[32,16], index: 1, kind: input, shape index: {}]
  %s2 = inlined_call_operand.hbm [shape: f32[32,1], index: 2, kind: input, shape index: {}]
  %s3 = inlined_call_operand.hbm [shape: f32[16,32], index: 3, kind: input, shape index: {}]
  %s4 = inlined_call_operand.hbm [shape: f32[16,1], index: 4, kind: input, shape index: {}]
  %s5 = inlined_call_operand.hbm [shape: f32[16,16], index: 5, kind: output, shape index: {}]
  %s6 = sld [smem:[#allocation0]]
  $region50: #{tpu_custom_call.1} parent=0
    _
  %s8 = ssub.s32 1, %s6
  %s9 = scalar_select 0, %s8, %s6
  $region1: #{tpu_custom_call.1} parent=0
    #allocation2 [shape = 'u8[8192]{0}', space=vmem, size = 0x2000, scoped, tag = 'input window, operand 0, single buffered']
    #allocation3 [shape = 's32[1]{0}', space=sflag, size = 0x4, scoped, tag = 'scoped memory for tpu_custom_call.1']
    #allocation4 [shape = 's32[1]{0}', space=sflag, size = 0x4, scoped, tag = 'scoped memory for tpu_custom_call.1']
    #allocation5 [shape = 'u8[16384]{0}', space=vmem, size = 0x4000, scoped, tag = 'input window, operand 1, single buffered']
    #allocation6 [shape = 's32[1]{0}', space=sflag, size = 0x4, scoped, tag = 'scoped memory for tpu_custom_call.1']
    #allocation7 [shape = 'u8[16384]{0}', space=vmem, size = 0x4000, scoped, tag = 'input window, operand 2, single buffered']
    #allocation8 [shape = 'u8[8192]{0}', space=vmem, size = 0x2000, scoped, tag = 'input window, operand 3, single buffered']
    #allocation9 [shape = 's32[1]{0}', space=sflag, size = 0x4, scoped, tag = 'scoped memory for tpu_custom_call.1']
    #allocation10 [shape = 'u8[8192]{0}', space=vmem, size = 0x2000, scoped, tag = 'input window, operand 4, single buffered']
    #allocation11 [shape = 'u8[8192]{0}', space=vmem, size = 0x2000, scoped, tag = 'output window, operand 0, single buffered']
    %10 = vsyncpa [#allocation3], 0
    %11 = vsyncpa [#allocation6], 0
    %12 = vsyncpa [#allocation9], 0
    %13 = vsyncpa [#allocation4], 0
    // Predicated region
    $region2: #{tpu_custom_call.1} parent=1 // pred_check
      _
    $region3: #{tpu_custom_call.1} parent=1 // pred_check_branch
      %15 = sbr.rel (0) target = $region5
    $region4: #{tpu_custom_call.1} parent=1 // pred_region
      %s17 = ssub.s32 256, 256
      %18 = vsyncadd [#allocation3], %s17
      %s19 = sshll.u32 [#allocation2], 4
      %s20 = int_to_ptr.vmem [resolvable:$true] %s19
      %25 = dma.hbm_to_vmem [thread:$0]  %s0, 256, %s20, [#allocation3], 128, 128, 8
    $region5: #{tpu_custom_call.1} parent=1 // pred_fallthru
      _
    // Predicated region
    $region6: #{tpu_custom_call.1} parent=1 // pred_check
      _
    $region7: #{tpu_custom_call.1} parent=1 // pred_check_branch
      %27 = sbr.rel (0) target = $region9
    $region8: #{tpu_custom_call.1} parent=1 // pred_region
      %s29 = ssub.s32 512, 512
      %30 = vsyncadd [#allocation6], %s29
      %s31 = sshll.u32 [#allocation5], 4
      %s32 = int_to_ptr.vmem [resolvable:$true] %s31
      %37 = dma.hbm_to_vmem [thread:$0]  %s1, 512, %s32, [#allocation6], 128, 128, 8
    $region9: #{tpu_custom_call.1} parent=1 // pred_fallthru
      _
    // Predicated region
    $region10: #{tpu_custom_call.1} parent=1 // pred_check
      _
    $region11: #{tpu_custom_call.1} parent=1 // pred_check_branch
      %39 = sbr.rel (0) target = $region13
    $region12: #{tpu_custom_call.1} parent=1 // pred_region
      %s41 = ssub.s32 512, 512
      %42 = vsyncadd [#allocation6], %s41
      %s43 = sshll.u32 [#allocation7], 4
      %s44 = int_to_ptr.vmem [resolvable:$true] %s43
      %49 = dma.hbm_to_vmem [thread:$0]  %s2, 512, %s44, [#allocation6], 128, 128, 8
    $region13: #{tpu_custom_call.1} parent=1 // pred_fallthru
      _
    // Predicated region
    $region14: #{tpu_custom_call.1} parent=1 // pred_check
      _
    $region15: #{tpu_custom_call.1} parent=1 // pred_check_branch
      %51 = sbr.rel (0) target = $region17
    $region16: #{tpu_custom_call.1} parent=1 // pred_region
      %s53 = ssub.s32 256, 256
      %54 = vsyncadd [#allocation9], %s53
      %s55 = sshll.u32 [#allocation8], 4
      %s56 = int_to_ptr.vmem [resolvable:$true] %s55
      %61 = dma.hbm_to_vmem [thread:$0]  %s3, 256, %s56, [#allocation9], 128, 128, 8
    $region17: #{tpu_custom_call.1} parent=1 // pred_fallthru
      _
    // Predicated region
    $region18: #{tpu_custom_call.1} parent=1 // pred_check
      _
    $region19: #{tpu_custom_call.1} parent=1 // pred_check_branch
      %63 = sbr.rel (0) target = $region21
    $region20: #{tpu_custom_call.1} parent=1 // pred_region
      %s65 = ssub.s32 256, 256
      %66 = vsyncadd [#allocation9], %s65
      %s67 = sshll.u32 [#allocation10], 4
      %s68 = int_to_ptr.vmem [resolvable:$true] %s67
      %73 = dma.hbm_to_vmem [thread:$0]  %s4, 256, %s68, [#allocation9], 128, 128, 8
    $region21: #{tpu_custom_call.1} parent=1 // pred_fallthru
      _
    // Predicated region
    $region22: #{tpu_custom_call.1} parent=1 // pred_check
      _
    $region23: #{tpu_custom_call.1} parent=1 // pred_check_branch
      %75 = sbr.rel (0) target = $region25
    $region24: #{tpu_custom_call.1} parent=1 // pred_region
      %76 = dma.done [#allocation3], 256
    $region25: #{tpu_custom_call.1} parent=1 // pred_fallthru
      _
    // Predicated region
    $region26: #{tpu_custom_call.1} parent=1 // pred_check
      _
    $region27: #{tpu_custom_call.1} parent=1 // pred_check_branch
      %78 = sbr.rel (0) target = $region29
    $region28: #{tpu_custom_call.1} parent=1 // pred_region
      %79 = dma.done [#allocation6], 512
    $region29: #{tpu_custom_call.1} parent=1 // pred_fallthru
      _
    // Predicated region
    $region30: #{tpu_custom_call.1} parent=1 // pred_check
      _
    $region31: #{tpu_custom_call.1} parent=1 // pred_check_branch
      %81 = sbr.rel (0) target = $region33
    $region32: #{tpu_custom_call.1} parent=1 // pred_region
      %82 = dma.done [#allocation6], 512
    $region33: #{tpu_custom_call.1} parent=1 // pred_fallthru
      _
    // Predicated region
    $region34: #{tpu_custom_call.1} parent=1 // pred_check
      _
    $region35: #{tpu_custom_call.1} parent=1 // pred_check_branch
      %84 = sbr.rel (0) target = $region37
    $region36: #{tpu_custom_call.1} parent=1 // pred_region
      %85 = dma.done [#allocation9], 256
    $region37: #{tpu_custom_call.1} parent=1 // pred_fallthru
      _
    // Predicated region
    $region38: #{tpu_custom_call.1} parent=1 // pred_check
      _
    $region39: #{tpu_custom_call.1} parent=1 // pred_check_branch
      %87 = sbr.rel (0) target = $region41
    $region40: #{tpu_custom_call.1} parent=1 // pred_region
      %88 = dma.done [#allocation9], 256
    $region41: #{tpu_custom_call.1} parent=1 // pred_fallthru
      _
    %v89 = vld [vmem:[#allocation2] sm:$0xff]
    %v90 = vld [vmem:[#allocation2 + $0x8] sm:$0xff]
    %v91 = vld [vmem:[#allocation5] sm:$0xff]
    %v92 = vld [vmem:[#allocation5 + $0x8] sm:$0xff]
    %v93 = vld [vmem:[#allocation5 + $0x10] sm:$0xff]
    %v94 = vld [vmem:[#allocation5 + $0x18] sm:$0xff]
    %v95 = vld [vmem:[#allocation7] sm:$0xff]
    %v96 = vld [vmem:[#allocation7 + $0x8] sm:$0xff]
    %v97 = vld [vmem:[#allocation7 + $0x10] sm:$0xff]
    %v98 = vld [vmem:[#allocation7 + $0x18] sm:$0xff]
    %100 = vset.pattern.permute.xlu0 0
    %101 = vperm.xlu0 %100, %v95
    %v102 = vpop.permute.xlu0 %101
    %105 = vset.pattern.permute.xlu0 0
    %106 = vperm.xlu0 %105, %v96
    %v107 = vpop.permute.xlu0 %106
    %110 = vset.pattern.permute.xlu0 0
    %111 = vperm.xlu0 %110, %v97
    %v112 = vpop.permute.xlu0 %111
    %115 = vset.pattern.permute.xlu0 0
    %116 = vperm.xlu0 %115, %v98
    %v117 = vpop.permute.xlu0 %116
    %vm119 = vcmask 130048
    %v121 = vsel %vm119, %v91, 0
    %v124 = vsel %vm119, %v92, 0
    %v127 = vsel %vm119, %v93, 0
    %v130 = vsel %vm119, %v94, 0
    %132 = vmatprep.subr.mxu0 0.0
    %133 = vmatpush1.msra.mxu0 %v89
    %134 = vmatprep.subr.mxu0 0.0
    %135 = vmatpush1.msra.mxu0 %v90
    %136 = vmatprep.subr.mxu0 0.0
    %137 = vmatpush1.msra.mxu0 0.0
    %138 = vmatprep.subr.mxu0 0.0
    %139 = vmatpush1.msra.mxu0 0.0
    %140 = vmatprep.subr.mxu0 0.0
    %141 = vmatpush1.msra.mxu0 0.0
    %142 = vmatprep.subr.mxu0 0.0
    %143 = vmatpush1.msra.mxu0 0.0
    %144 = vmatprep.subr.mxu0 0.0
    %145 = vmatpush1.msra.mxu0 0.0
    %146 = vmatprep.subr.mxu0 0.0
    %147 = vmatpush1.msra.mxu0 0.0
    %148 = vmatprep.subr.mxu0 0.0
    %149 = vmatpush1.msra.mxu0 0.0
    %150 = vmatprep.subr.mxu0 0.0
    %151 = vmatpush1.msra.mxu0 0.0
    %152 = vmatprep.subr.mxu0 0.0
    %153 = vmatpush1.msra.mxu0 0.0
    %154 = vmatprep.subr.mxu0 0.0
    %155 = vmatpush1.msra.mxu0 0.0
    %156 = vmatprep.subr.mxu0 0.0
    %157 = vmatpush1.msra.mxu0 0.0
    %158 = vmatprep.subr.mxu0 0.0
    %159 = vmatpush1.msra.mxu0 0.0
    %160 = vmatprep.subr.mxu0 0.0
    %161 = vmatpush1.msra.mxu0 0.0
    %162 = vmatprep.subr.mxu0 0.0
    %163 = vmatpush1.msra.mxu0 0.0
    %164 = vmatprep.subr.mxu0 0.0
    %165 = vmatpush1.msra.mxu0 0.0
    %166 = vmatprep.subr.mxu0 0.0
    %167 = vmatpush1.msra.mxu0 0.0
    %168 = vmatprep.subr.mxu0 0.0
    %169 = vmatpush1.msra.mxu0 0.0
    %170 = vmatprep.subr.mxu0 0.0
    %171 = vmatpush1.msra.mxu0 0.0
    %172 = vmatprep.subr.mxu0 0.0
    %173 = vmatpush1.msra.mxu0 0.0
    %174 = vmatprep.subr.mxu0 0.0
    %175 = vmatpush1.msra.mxu0 0.0
    %176 = vmatprep.subr.mxu0 0.0
    %177 = vmatpush1.msra.mxu0 0.0
    %178 = vmatprep.subr.mxu0 0.0
    %179 = vmatpush1.msra.mxu0 0.0
    %180 = vmatprep.subr.mxu0 0.0
    %181 = vmatpush1.msra.mxu0 0.0
    %182 = vmatprep.subr.mxu0 0.0
    %183 = vmatpush1.msra.mxu0 0.0
    %184 = vmatprep.subr.mxu0 0.0
    %185 = vmatpush1.msra.mxu0 0.0
    %186 = vmatprep.subr.mxu0 0.0
    %187 = vmatpush1.msra.mxu0 0.0
    %188 = vmatprep.subr.mxu0 0.0
    %189 = vmatpush1.msra.mxu0 0.0
    %190 = vmatprep.subr.mxu0 0.0
    %191 = vmatpush1.msra.mxu0 0.0
    %192 = vmatprep.subr.mxu0 0.0
    %193 = vmatpush1.msra.mxu0 0.0
    %194 = vmatprep.subr.mxu0 0.0
    %195 = vmatpush1.msra.mxu0 0.0
    %196 = vmatprep.mubr.f32.mxu0 0.0
    %197 = vmatmul.mubr.f32.gmra.mrb[0].mxu0 %v121
    %v198 = vpop.f32.mrb[0].mxu0
    %v199 = vadd.f32 %v102, %v198
    %v200 = vpop.f32.mrb[0].mxu0
    %201 = vmatprep.mubr.f32.mxu0 0.0
    %202 = vmatmul.mubr.f32.gmra.mrb[0].mxu0 %v124
    %v203 = vpop.f32.mrb[0].mxu0
    %v204 = vadd.f32 %v107, %v203
    %v205 = vpop.f32.mrb[0].mxu0
    %206 = vmatprep.mubr.f32.mxu0 0.0
    %207 = vmatmul.mubr.f32.gmra.mrb[0].mxu0 %v127
    %v208 = vpop.f32.mrb[0].mxu0
    %v209 = vadd.f32 %v112, %v208
    %v210 = vpop.f32.mrb[0].mxu0
    %211 = vmatprep.mubr.f32.mxu0 0.0
    %212 = vmatmul.mubr.f32.gmra.mrb[0].mxu0 %v130
    %v213 = vpop.f32.mrb[0].mxu0
    %v214 = vadd.f32 %v117, %v213
    %v215 = vpop.f32.mrb[0].mxu0
    %216 = vdwg.mxu0
    %v217 = vtanh.pop %v199
    %v218 = vtanh.pop %v204
    %v219 = vtanh.pop %v209
    %v220 = vtanh.pop %v214
    %v221 = vld [vmem:[#allocation8] sm:$0xff]
    %v222 = vld [vmem:[#allocation8 + $0x8] sm:$0xff]
    %v223 = vld [vmem:[#allocation10] sm:$0xff]
    %v224 = vld [vmem:[#allocation10 + $0x8] sm:$0xff]
    %226 = vset.pattern.permute.xlu0 0
    %227 = vperm.xlu0 %226, %v223
    %v228 = vpop.permute.xlu0 %227
    %231 = vset.pattern.permute.xlu0 0
    %232 = vperm.xlu0 %231, %v224
    %v233 = vpop.permute.xlu0 %232
    %vm235 = vcmask 261120
    %v237 = vsel %vm235, %v221, 0
    %v240 = vsel %vm235, %v222, 0
    %242 = vmatprep.subr.mxu0 0.0
    %243 = vmatpush1.msra.mxu0 %v217
    %244 = vmatprep.subr.mxu0 0.0
    %245 = vmatpush1.msra.mxu0 %v218
    %246 = vmatprep.subr.mxu0 0.0
    %247 = vmatpush1.msra.mxu0 %v219
    %248 = vmatprep.subr.mxu0 0.0
    %249 = vmatpush1.msra.mxu0 %v220
    %250 = vmatprep.subr.mxu0 0.0
    %251 = vmatpush1.msra.mxu0 0.0
    %252 = vmatprep.subr.mxu0 0.0
    %253 = vmatpush1.msra.mxu0 0.0
    %254 = vmatprep.subr.mxu0 0.0
    %255 = vmatpush1.msra.mxu0 0.0
    %256 = vmatprep.subr.mxu0 0.0
    %257 = vmatpush1.msra.mxu0 0.0
    %258 = vmatprep.subr.mxu0 0.0
    %259 = vmatpush1.msra.mxu0 0.0
    %260 = vmatprep.subr.mxu0 0.0
    %261 = vmatpush1.msra.mxu0 0.0
    %262 = vmatprep.subr.mxu0 0.0
    %263 = vmatpush1.msra.mxu0 0.0
    %264 = vmatprep.subr.mxu0 0.0
    %265 = vmatpush1.msra.mxu0 0.0
    %266 = vmatprep.subr.mxu0 0.0
    %267 = vmatpush1.msra.mxu0 0.0
    %268 = vmatprep.subr.mxu0 0.0
    %269 = vmatpush1.msra.mxu0 0.0
    %270 = vmatprep.subr.mxu0 0.0
    %271 = vmatpush1.msra.mxu0 0.0
    %272 = vmatprep.subr.mxu0 0.0
    %273 = vmatpush1.msra.mxu0 0.0
    %274 = vmatprep.subr.mxu0 0.0
    %275 = vmatpush1.msra.mxu0 0.0
    %276 = vmatprep.subr.mxu0 0.0
    %277 = vmatpush1.msra.mxu0 0.0
    %278 = vmatprep.subr.mxu0 0.0
    %279 = vmatpush1.msra.mxu0 0.0
    %280 = vmatprep.subr.mxu0 0.0
    %281 = vmatpush1.msra.mxu0 0.0
    %282 = vmatprep.subr.mxu0 0.0
    %283 = vmatpush1.msra.mxu0 0.0
    %284 = vmatprep.subr.mxu0 0.0
    %285 = vmatpush1.msra.mxu0 0.0
    %286 = vmatprep.subr.mxu0 0.0
    %287 = vmatpush1.msra.mxu0 0.0
    %288 = vmatprep.subr.mxu0 0.0
    %289 = vmatpush1.msra.mxu0 0.0
    %290 = vmatprep.subr.mxu0 0.0
    %291 = vmatpush1.msra.mxu0 0.0
    %292 = vmatprep.subr.mxu0 0.0
    %293 = vmatpush1.msra.mxu0 0.0
    %294 = vmatprep.subr.mxu0 0.0
    %295 = vmatpush1.msra.mxu0 0.0
    %296 = vmatprep.subr.mxu0 0.0
    %297 = vmatpush1.msra.mxu0 0.0
    %298 = vmatprep.subr.mxu0 0.0
    %299 = vmatpush1.msra.mxu0 0.0
    %300 = vmatprep.subr.mxu0 0.0
    %301 = vmatpush1.msra.mxu0 0.0
    %302 = vmatprep.subr.mxu0 0.0
    %303 = vmatpush1.msra.mxu0 0.0
    %304 = vmatprep.subr.mxu0 0.0
    %305 = vmatpush1.msra.mxu0 0.0
    %306 = vmatprep.mubr.f32.mxu0 0.0
    %307 = vmatmul.mubr.f32.gmra.mrb[0].mxu0 %v237
    %v308 = vpop.f32.mrb[0].mxu0
    %v309 = vadd.f32 %v228, %v308
    %v310 = vpop.f32.mrb[0].mxu0
    %311 = vmatprep.mubr.f32.mxu0 0.0
    %312 = vmatmul.mubr.f32.gmra.mrb[0].mxu0 %v240
    %v313 = vpop.f32.mrb[0].mxu0
    %v314 = vadd.f32 %v233, %v313
    %v315 = vpop.f32.mrb[0].mxu0
    %316 = vdwg.mxu0
    %v317 = vsel %vm119, %v309, -inf
    %v318 = vsel %vm119, %v314, -inf
    %v319 = vmax.f32 %v317, %v318
    %v320 = vrot.slane %v319, 4
    %v321 = vmax.f32 %v319, %v320
    %v322 = vrot.slane %v321, 2
    %v323 = vmax.f32 %v321, %v322
    %v324 = vrot.slane %v323, 1
    %v325 = vmax.f32 %v323, %v324
    %v326 = vsub.f32 %v309, %v325
    %v327 = vsub.f32 %v314, %v325
    %v328 = vmul.f32 %v326, 1.442695
    %v329 = vpow.pop %v328
    %v330 = vmul.f32 %v327, 1.442695
    %v331 = vpow.pop %v330
    %v332 = vsel %vm119, %v329, 0.0
    %v333 = vsel %vm119, %v331, 0.0
    %v334 = vadd.f32 %v332, %v333
    %v335 = vrot.slane %v334, 4
    %v336 = vadd.f32 %v334, %v335
    %v337 = vrot.slane %v336, 2
    %v338 = vadd.f32 %v336, %v337
    %v339 = vrot.slane %v338, 1
    %v340 = vadd.f32 %v338, %v339
    %v341 = vrcp.pop %v340
    %v342 = vmul.f32 %v329, %v341
    %v343 = vmul.f32 %v331, %v341
    %344 = vst.msk [vmem:[#allocation11] sm:$0xff] %vm119, %v342
    %345 = vst.msk [vmem:[#allocation11 + $0x8] sm:$0xff] %vm119, %v343
    // Predicated region
    $region42: #{tpu_custom_call.1} parent=1 // pred_check
      _
    $region43: #{tpu_custom_call.1} parent=1 // pred_check_branch
      %347 = sbr.rel (0) target = $region45
    $region44: #{tpu_custom_call.1} parent=1 // pred_region
      %s349 = ssub.s32 256, 256
      %350 = vsyncadd [#allocation4], %s349
      %s351 = sshll.u32 [#allocation11], 4
      %s352 = int_to_ptr.vmem [resolvable:$true] %s351
      %357 = dma.vmem_to_hbm [thread:$0]  %s352, 256, %s5, [#allocation4], 128, 128, 8
    $region45: #{tpu_custom_call.1} parent=1 // pred_fallthru
      _
    // Predicated region
    $region46: #{tpu_custom_call.1} parent=1 // pred_check
      _
    $region47: #{tpu_custom_call.1} parent=1 // pred_check_branch
      %359 = sbr.rel (0) target = $region49
    $region48: #{tpu_custom_call.1} parent=1 // pred_region
      %360 = dma.done [#allocation4], 256
    $region49: #{tpu_custom_call.1} parent=1 // pred_fallthru
      _
    %361 = vsyncpa [#allocation3], 1
    %362 = vsyncpa [#allocation6], 1
    %363 = vsyncpa [#allocation9], 1
    %364 = vsyncpa [#allocation4], 1

</llo_original>
